<compile_context>
chip_gen: v6e
topology: v6e:2x2x1
jax: 0.10.0
libtpu: 0.0.40
codegen_flags: <defaults>
</compile_context>

<pallas_src>
import math

import jax
import jax.numpy as jnp
from jax import lax
from jax.experimental import pallas as pl
from jax.experimental.pallas import tpu as pltpu

IN_F, H1_F, H2_F, OUT_F = 10, 5, 3, 1

# Contract feature (last) dim of both operands: h1 = W1 @ x^T without ever
# materializing x^T in HBM.  Same dimension numbers as flash-attention q@k^T.
_TRANS_B = (((1,), (1,)), ((), ()))


def mlp_kernel(x_ref, w1_ref, b1_ref, w2_ref, b2_ref, w3_ref, b3_ref, o_ref):
    # x_ref : (tb, 10)  streamed natural-layout batch tile
    # wN    : (out_f, in_f) torch layout, VMEM-resident across grid steps
    # bN    : (out_f, 1)    column bias, broadcasts over the tb lanes
    # o_ref : (1, tb)   lane-dense output store
    x = x_ref[...]
    h1 = lax.dot_general(w1_ref[...], x, _TRANS_B,
                         preferred_element_type=jnp.float32) + b1_ref[...]
    h1 = jnp.maximum(h1, 0.0)                                  # (5, tb)
    h2 = jnp.dot(w2_ref[...], h1,
                 preferred_element_type=jnp.float32) + b2_ref[...]
    h2 = jnp.maximum(h2, 0.0)                                  # (3, tb)
    o_ref[...] = (jnp.dot(w3_ref[...], h2,
                          preferred_element_type=jnp.float32) + b3_ref[...])


def _round_up(n, m):
    return ((n + m - 1) // m) * m


def _vmem_limit_bytes(tb):
    # (tb, 10) f32 block lane-pads 10 -> 128; (1, tb) block sublane-pads 1 -> 8.
    x_buf = tb * 128 * 4                 # per input buffer
    out_buf = 8 * tb * 4                 # per output buffer
    interm = (16 + 8 + 8) * tb * 4       # x^T staging + h1 + h2 (sublane-padded)
    est = 2 * x_buf + 2 * out_buf + interm + (2 << 20)
    return max(32 << 20, min(int(1.5 * est), 100 << 20))


def mynet_forward(x, params, *, tb=24576):
    """x: (B, 10) float32 -> (B, 1) float32, same semantics as MyNet.forward."""
    w1, b1, w2, b2, w3, b3 = params
    B, F = x.shape
    assert F == IN_F

    tb = _round_up(min(tb, B), 128)      # lane-dense output blocks need tb % 128 == 0
    grid = (pl.cdiv(B, tb),)             # uneven last block handled by Pallas masking

    resident = lambda a: pl.BlockSpec(a.shape, lambda i: (0, 0))

    out_t = pl.pallas_call(
        mlp_kernel,
        out_shape=jax.ShapeDtypeStruct((OUT_F, B), jnp.float32),
        grid=grid,
        in_specs=[
            pl.BlockSpec((tb, IN_F), lambda i: (i, 0)),   # streamed x tile
            resident(w1), resident(b1),
            resident(w2), resident(b2),
            resident(w3), resident(b3),
        ],
        out_specs=pl.BlockSpec((OUT_F, tb), lambda i: (0, i)),
        compiler_params=pltpu.CompilerParams(
            dimension_semantics=("parallel",),            # megacore on v7x
            vmem_limit_bytes=_vmem_limit_bytes(tb)),
        cost_estimate=pl.CostEstimate(
            flops=2 * (IN_F * H1_F + H1_F * H2_F + H2_F * OUT_F) * B,
            transcendentals=0,
            bytes_accessed=(IN_F + OUT_F) * 4 * B),
    )(x, w1, b1, w2, b2, w3, b3)

    # (1, B) -> (B, 1) is a free row-major reshape, not an HBM transpose pass.
    return out_t.reshape(B, OUT_F)


def init_linear(key, in_f, out_f):
    # Deterministic init mimicking torch.nn.Linear (uniform +/- 1/sqrt(in_f)).
    kw, kb = jax.random.split(key)
    bound = 1.0 / math.sqrt(in_f)
    w = jax.random.uniform(kw, (out_f, in_f), jnp.float32, -bound, bound)  # torch layout
    b = jax.random.uniform(kb, (out_f, 1), jnp.float32, -bound, bound)     # column bias
    return w, b


def reference_forward(x, params):
    w1, b1, w2, b2, w3, b3 = params
    h1 = jnp.maximum(x @ w1.T + b1[:, 0], 0.0)
    h2 = jnp.maximum(h1 @ w2.T + b2[:, 0], 0.0)
    return h2 @ w3.T + b3[:, 0]


if __name__ == "__main__":
    key = jax.random.PRNGKey(0)
    kx, k1, k2, k3 = jax.random.split(key, 4)

    B = 512
    x = jax.random.normal(kx, (B, IN_F), jnp.float32)

    w1, b1 = init_linear(k1, IN_F, H1_F)
    w2, b2 = init_linear(k2, H1_F, H2_F)
    w3, b3 = init_linear(k3, H2_F, OUT_F)
    params = (w1, b1, w2, b2, w3, b3)

    # tb=128 -> grid of 4 batch tiles (exercises the pipelined grid path).
    out = jax.block_until_ready(mynet_forward(x, params, tb=128))

    ref = reference_forward(x, params)
    assert out.shape == (B, OUT_F)
    assert jnp.allclose(out, ref, atol=1e-5, rtol=1e-5)
    print("KERNEL_OK")
</pallas_src>

<mosaic_0001>
module attributes {stable_mosaic.version = 11 : i64} {
  func.func @mlp_kernel(%arg0: i32, %arg1: memref<128x10xf32, #tpu.memory_space<vmem>>, %arg2: memref<5x10xf32, #tpu.memory_space<vmem>>, %arg3: memref<5x1xf32, #tpu.memory_space<vmem>>, %arg4: memref<3x5xf32, #tpu.memory_space<vmem>>, %arg5: memref<3x1xf32, #tpu.memory_space<vmem>>, %arg6: memref<1x3xf32, #tpu.memory_space<vmem>>, %arg7: memref<1x1xf32, #tpu.memory_space<vmem>>, %arg8: memref<1x128xf32, #tpu.memory_space<vmem>>) attributes {dimension_semantics = [#tpu.dimension_semantics<parallel>], iteration_bounds = array<i64: 4>, scalar_prefetch = 0 : i64, scratch_operands = 0 : i64, tpu.core_type = #tpu.core_type<tc>, window_params = [{transform_indices = @transform_0, window_bounds = array<i64: 128, 10>}, {pipeline_mode = #tpu.pipeline_mode<synchronous>, transform_indices = @transform_1, window_bounds = array<i64: 5, 10>}, {pipeline_mode = #tpu.pipeline_mode<synchronous>, transform_indices = @transform_2, window_bounds = array<i64: 5, 1>}, {pipeline_mode = #tpu.pipeline_mode<synchronous>, transform_indices = @transform_3, window_bounds = array<i64: 3, 5>}, {pipeline_mode = #tpu.pipeline_mode<synchronous>, transform_indices = @transform_4, window_bounds = array<i64: 3, 1>}, {pipeline_mode = #tpu.pipeline_mode<synchronous>, transform_indices = @transform_5, window_bounds = array<i64: 1, 3>}, {pipeline_mode = #tpu.pipeline_mode<synchronous>, transform_indices = @transform_6, window_bounds = array<i64: 1, 1>}, {transform_indices = @transform_7, window_bounds = array<i64: 1, 128>}]} {
    %c0 = arith.constant 0 : index
    %c0_0 = arith.constant 0 : index
    %0 = vector.load %arg1[%c0, %c0_0] : memref<128x10xf32, #tpu.memory_space<vmem>>, vector<128x10xf32>
    %c0_1 = arith.constant 0 : index
    %c0_2 = arith.constant 0 : index
    %1 = vector.load %arg2[%c0_1, %c0_2] : memref<5x10xf32, #tpu.memory_space<vmem>>, vector<5x10xf32>
    %cst = arith.constant dense<0.000000e+00> : vector<5x128xf32>
    %2 = tpu.matmul %1, %0, %cst {dimension_numbers = #tpu.dot_dimension_numbers<[1], [1], [0], [0], [0, 0, 1, 0], [], []>} : vector<5x10xf32>, vector<128x10xf32>, vector<5x128xf32> -> vector<5x128xf32>
    %c0_3 = arith.constant 0 : index
    %c0_4 = arith.constant 0 : index
    %3 = vector.load %arg3[%c0_3, %c0_4] : memref<5x1xf32, #tpu.memory_space<vmem>>, vector<5x1xf32>
    %4 = vector.broadcast %3 : vector<5x1xf32> to vector<5x128xf32>
    %5 = arith.addf %2, %4 : vector<5x128xf32>
    %cst_5 = arith.constant 0.000000e+00 : f32
    %6 = vector.broadcast %cst_5 : f32 to vector<5x128xf32>
    %7 = arith.maximumf %5, %6 : vector<5x128xf32>
    %c0_6 = arith.constant 0 : index
    %c0_7 = arith.constant 0 : index
    %8 = vector.load %arg4[%c0_6, %c0_7] : memref<3x5xf32, #tpu.memory_space<vmem>>, vector<3x5xf32>
    %cst_8 = arith.constant dense<0.000000e+00> : vector<3x128xf32>
    %9 = tpu.matmul %8, %7, %cst_8 {dimension_numbers = #tpu.dot_dimension_numbers<[1], [0], [0], [1], [0, 0, 1, 1], [], []>} : vector<3x5xf32>, vector<5x128xf32>, vector<3x128xf32> -> vector<3x128xf32>
    %c0_9 = arith.constant 0 : index
    %c0_10 = arith.constant 0 : index
    %10 = vector.load %arg5[%c0_9, %c0_10] : memref<3x1xf32, #tpu.memory_space<vmem>>, vector<3x1xf32>
    %11 = vector.broadcast %10 : vector<3x1xf32> to vector<3x128xf32>
    %12 = arith.addf %9, %11 : vector<3x128xf32>
    %cst_11 = arith.constant 0.000000e+00 : f32
    %13 = vector.broadcast %cst_11 : f32 to vector<3x128xf32>
    %14 = arith.maximumf %12, %13 : vector<3x128xf32>
    %c0_12 = arith.constant 0 : index
    %c0_13 = arith.constant 0 : index
    %15 = vector.load %arg6[%c0_12, %c0_13] : memref<1x3xf32, #tpu.memory_space<vmem>>, vector<1x3xf32>
    %cst_14 = arith.constant dense<0.000000e+00> : vector<1x128xf32>
    %16 = tpu.matmul %15, %14, %cst_14 {dimension_numbers = #tpu.dot_dimension_numbers<[1], [0], [0], [1], [0, 0, 1, 1], [], []>} : vector<1x3xf32>, vector<3x128xf32>, vector<1x128xf32> -> vector<1x128xf32>
    %c0_15 = arith.constant 0 : index
    %c0_16 = arith.constant 0 : index
    %17 = vector.load %arg7[%c0_15, %c0_16] : memref<1x1xf32, #tpu.memory_space<vmem>>, vector<1x1xf32>
    %18 = vector.broadcast %17 : vector<1x1xf32> to vector<1x128xf32>
    %19 = arith.addf %16, %18 : vector<1x128xf32>
    %c0_17 = arith.constant 0 : index
    %c0_18 = arith.constant 0 : index
    %20 = vector.load %arg8[%c0_17, %c0_18] : memref<1x128xf32, #tpu.memory_space<vmem>>, vector<1x128xf32>
    tpu.vector_store %arg8[%c0_17, %c0_18], %19 {strides = array<i32>} : memref<1x128xf32, #tpu.memory_space<vmem>>, vector<1x128xf32>,
    return
  }
  func.func @transform_0(%arg0: i32) -> (i32, i32) {
    %c0_i32 = arith.constant 0 : i32
    %c0_i32_0 = arith.constant 0 : i32
    return %arg0, %c0_i32 : i32, i32
  }
  func.func @transform_1(%arg0: i32) -> (i32, i32) {
    %c0_i32 = arith.constant 0 : i32
    %c0_i32_0 = arith.constant 0 : i32
    %c0_i32_1 = arith.constant 0 : i32
    return %c0_i32, %c0_i32_0 : i32, i32
  }
  func.func @transform_2(%arg0: i32) -> (i32, i32) {
    %c0_i32 = arith.constant 0 : i32
    %c0_i32_0 = arith.constant 0 : i32
    %c0_i32_1 = arith.constant 0 : i32
    return %c0_i32, %c0_i32_0 : i32, i32
  }
  func.func @transform_3(%arg0: i32) -> (i32, i32) {
    %c0_i32 = arith.constant 0 : i32
    %c0_i32_0 = arith.constant 0 : i32
    %c0_i32_1 = arith.constant 0 : i32
    return %c0_i32, %c0_i32_0 : i32, i32
  }
  func.func @transform_4(%arg0: i32) -> (i32, i32) {
    %c0_i32 = arith.constant 0 : i32
    %c0_i32_0 = arith.constant 0 : i32
    %c0_i32_1 = arith.constant 0 : i32
    return %c0_i32, %c0_i32_0 : i32, i32
  }
  func.func @transform_5(%arg0: i32) -> (i32, i32) {
    %c0_i32 = arith.constant 0 : i32
    %c0_i32_0 = arith.constant 0 : i32
    %c0_i32_1 = arith.constant 0 : i32
    return %c0_i32, %c0_i32_0 : i32, i32
  }
  func.func @transform_6(%arg0: i32) -> (i32, i32) {
    %c0_i32 = arith.constant 0 : i32
    %c0_i32_0 = arith.constant 0 : i32
    %c0_i32_1 = arith.constant 0 : i32
    return %c0_i32, %c0_i32_0 : i32, i32
  }
  func.func @transform_7(%arg0: i32) -> (i32, i32) {
    %c0_i32 = arith.constant 0 : i32
    %c0_i32_0 = arith.constant 0 : i32
    return %c0_i32, %arg0 : i32, i32
  }
}

</mosaic_0001>

<llo_original>
// kernel: tpu_custom_call.1
$region0: #{tpu_custom_call.1}
  #allocation0 [shape = 'u32[]', space=smem, size = 0x4, offset = 0x4, fixed_abs, tag = 'smem constant byte address 0x4 - core index']
  #allocation1 [shape = 'u32[144,128]{1,0:T(1,128)}', space=vmem, size = 0x12000, scoped, tag = 'internal scratch']
  #allocation2 [shape = 'f32[1,1]{1,0:T(1,128)S(1)}', space=vmem, size = 0x200, scoped, tag = 'scoped memory for tpu_custom_call.1']
  %s0 = inlined_call_operand.vmem [shape: f32[512,10], index: 0, kind: input, shape index: {}]
  %s1 = inlined_call_operand.vmem [shape: f32[5,10], index: 1, kind: input, shape index: {}]
  %s2 = inlined_call_operand.vmem [shape: f32[5,1], index: 2, kind: input, shape index: {}]
  %s3 = inlined_call_operand.vmem [shape: f32[3,5], index: 3, kind: input, shape index: {}]
  %s4 = inlined_call_operand.vmem [shape: f32[3,1], index: 4, kind: input, shape index: {}]
  %s5 = inlined_call_operand.vmem [shape: f32[1,3], index: 5, kind: input, shape index: {}]
  %s6 = inlined_call_operand.<no memory space> [shape: f32[1,1], index: 6, kind: input, shape index: {}]
  %s7 = inlined_call_operand.hbm [shape: f32[1,512], index: 7, kind: output, shape index: {}]
  %s8 = sld [smem:[#allocation0]]
  $region61: #{tpu_custom_call.1} parent=0
    _
  %s10 = ssub.s32 1, %s8
  %s11 = scalar_select 0, %s10, %s8
  %v12 = vstv %s6
  %13 = vst [vmem:[#allocation2] sm:$0x1] %v12
  $region1: #{tpu_custom_call.1} parent=0
    #allocation3 [shape = 'u8[1024]{0}', space=vmem, size = 0x400, scoped, tag = 'output window, operand 0']
    #allocation4 [shape = 's32[2]{0}', space=sflag, size = 0x8, scoped, tag = 'scoped memory for tpu_custom_call.1']
    %14 = vsyncpa [#allocation4], 0
    %s15 = scalar_lea.sflag [#allocation4], 1
    %16 = vsyncpa %s15, 0
    loop: start=0, step=1, limit=6
    $region2: #{tpu_custom_call.1} parent=1 // loop_pre_header
      _
    $region3: #{tpu_custom_call.1} parent=1 // loop_header
      %s18 = sphi 0, %s22
      %p19 = scmp.ge.s32.totalorder %s18, 6
      %s28 = sphi 0, %s30
      %s31 = sphi 0, %s28
      %s32 = sphi 0, %s31
      %s48 = sphi 0, %s32
      %s52 = sphi 0, %s52
      %s54 = sphi 0, %s52
      %s55 = sphi 0, %s54
      %s69 = sphi 0, %s55
      %s73 = sphi 0, %s73
      %s75 = sphi 0, %s73
      %s76 = sphi 0, %s75
      %s90 = sphi 0, %s76
      %s94 = sphi 0, %s94
      %s96 = sphi 0, %s94
      %s97 = sphi 0, %s96
      %s111 = sphi 0, %s97
      %s115 = sphi 0, %s115
      %s117 = sphi 0, %s115
      %s118 = sphi 0, %s117
      %s132 = sphi 0, %s118
      %s136 = sphi 0, %s136
      %s138 = sphi 0, %s136
      %s139 = sphi 0, %s138
      %s153 = sphi 0, %s139
      %s157 = sphi 0, %s157
      %s159 = sphi 0, %s157
      %s160 = sphi 0, %s159
      %s174 = sphi 0, %s160
      %s180 = sphi 0, %s182
      %s183 = sphi 0, %s180
      %s184 = sphi 0, %s183
      %s200 = sphi 0, %s184
    $region4: #{tpu_custom_call.1} parent=1 // loop_header_branch
      %21 = sbr.rel (%p19) target = $region8
    $region5: #{tpu_custom_call.1} parent=1 // loop_body
      %s23 = ssub.s32 %s18, 1
      %s24 = ssub.s32 %s18, 2
      %s25 = sadd.s32 %s18, 1
      %s26 = ssub.s32 %s18, %s25
      %p27 = scmp.eq.s32.totalorder %s26, 0
      %s29 = sadd.s32 %s28, 1
      %s30 = scalar_select %p27, %s28, %s29
      %p33 = pneg %p27
      %p34 = scmp.eq.s32.totalorder %s18, 3
      %p35 = por %p33, %p34
      %p36 = scmp.ne.s32.totalorder %s28, %s31
      %p37 = scmp.eq.s32.totalorder %s18, 0
      %p38 = por %p36, %p37
      %p39 = scmp.ne.s32.totalorder %s28, %s31
      %p40 = scmp.eq.s32.totalorder %s23, 3
      %p41 = por %p39, %p40
      %p42 = scmp.ne.s32.totalorder %s31, %s32
      %p43 = scmp.eq.s32.totalorder %s23, 0
      %p44 = por %p42, %p43
      %p45 = scmp.ne.s32.totalorder %s31, %s32
      %p46 = scmp.eq.s32.totalorder %s24, 3
      %p47 = por %p45, %p46
      %p49 = scmp.ne.s32.totalorder %s32, %s48
      %p50 = scmp.eq.s32.totalorder %s24, 0
      %p51 = por %p49, %p50
      %s53 = sadd.s32 %s52, 1
      %p56 = scmp.eq.s32.totalorder %s18, 3
      %p57 = scmp.ne.s32.totalorder %s52, %s54
      %p58 = scmp.eq.s32.totalorder %s18, 0
      %p59 = por %p57, %p58
      %p60 = scmp.ne.s32.totalorder %s52, %s54
      %p61 = scmp.eq.s32.totalorder %s23, 3
      %p62 = por %p60, %p61
      %p63 = scmp.ne.s32.totalorder %s54, %s55
      %p64 = scmp.eq.s32.totalorder %s23, 0
      %p65 = por %p63, %p64
      %p66 = scmp.ne.s32.totalorder %s54, %s55
      %p67 = scmp.eq.s32.totalorder %s24, 3
      %p68 = por %p66, %p67
      %p70 = scmp.ne.s32.totalorder %s55, %s69
      %p71 = scmp.eq.s32.totalorder %s24, 0
      %p72 = por %p70, %p71
      %s74 = sadd.s32 %s73, 1
      %p77 = scmp.eq.s32.totalorder %s18, 3
      %p78 = scmp.ne.s32.totalorder %s73, %s75
      %p79 = scmp.eq.s32.totalorder %s18, 0
      %p80 = por %p78, %p79
      %p81 = scmp.ne.s32.totalorder %s73, %s75
      %p82 = scmp.eq.s32.totalorder %s23, 3
      %p83 = por %p81, %p82
      %p84 = scmp.ne.s32.totalorder %s75, %s76
      %p85 = scmp.eq.s32.totalorder %s23, 0
      %p86 = por %p84, %p85
      %p87 = scmp.ne.s32.totalorder %s75, %s76
      %p88 = scmp.eq.s32.totalorder %s24, 3
      %p89 = por %p87, %p88
      %p91 = scmp.ne.s32.totalorder %s76, %s90
      %p92 = scmp.eq.s32.totalorder %s24, 0
      %p93 = por %p91, %p92
      %s95 = sadd.s32 %s94, 1
      %p98 = scmp.eq.s32.totalorder %s18, 3
      %p99 = scmp.ne.s32.totalorder %s94, %s96
      %p100 = scmp.eq.s32.totalorder %s18, 0
      %p101 = por %p99, %p100
      %p102 = scmp.ne.s32.totalorder %s94, %s96
      %p103 = scmp.eq.s32.totalorder %s23, 3
      %p104 = por %p102, %p103
      %p105 = scmp.ne.s32.totalorder %s96, %s97
      %p106 = scmp.eq.s32.totalorder %s23, 0
      %p107 = por %p105, %p106
      %p108 = scmp.ne.s32.totalorder %s96, %s97
      %p109 = scmp.eq.s32.totalorder %s24, 3
      %p110 = por %p108, %p109
      %p112 = scmp.ne.s32.totalorder %s97, %s111
      %p113 = scmp.eq.s32.totalorder %s24, 0
      %p114 = por %p112, %p113
      %s116 = sadd.s32 %s115, 1
      %p119 = scmp.eq.s32.totalorder %s18, 3
      %p120 = scmp.ne.s32.totalorder %s115, %s117
      %p121 = scmp.eq.s32.totalorder %s18, 0
      %p122 = por %p120, %p121
      %p123 = scmp.ne.s32.totalorder %s115, %s117
      %p124 = scmp.eq.s32.totalorder %s23, 3
      %p125 = por %p123, %p124
      %p126 = scmp.ne.s32.totalorder %s117, %s118
      %p127 = scmp.eq.s32.totalorder %s23, 0
      %p128 = por %p126, %p127
      %p129 = scmp.ne.s32.totalorder %s117, %s118
      %p130 = scmp.eq.s32.totalorder %s24, 3
      %p131 = por %p129, %p130
      %p133 = scmp.ne.s32.totalorder %s118, %s132
      %p134 = scmp.eq.s32.totalorder %s24, 0
      %p135 = por %p133, %p134
      %s137 = sadd.s32 %s136, 1
      %p140 = scmp.eq.s32.totalorder %s18, 3
      %p141 = scmp.ne.s32.totalorder %s136, %s138
      %p142 = scmp.eq.s32.totalorder %s18, 0
      %p143 = por %p141, %p142
      %p144 = scmp.ne.s32.totalorder %s136, %s138
      %p145 = scmp.eq.s32.totalorder %s23, 3
      %p146 = por %p144, %p145
      %p147 = scmp.ne.s32.totalorder %s138, %s139
      %p148 = scmp.eq.s32.totalorder %s23, 0
      %p149 = por %p147, %p148
      %p150 = scmp.ne.s32.totalorder %s138, %s139
      %p151 = scmp.eq.s32.totalorder %s24, 3
      %p152 = por %p150, %p151
      %p154 = scmp.ne.s32.totalorder %s139, %s153
      %p155 = scmp.eq.s32.totalorder %s24, 0
      %p156 = por %p154, %p155
      %s158 = sadd.s32 %s157, 1
      %p161 = scmp.eq.s32.totalorder %s18, 3
      %p162 = scmp.ne.s32.totalorder %s157, %s159
      %p163 = scmp.eq.s32.totalorder %s18, 0
      %p164 = por %p162, %p163
      %p165 = scmp.ne.s32.totalorder %s157, %s159
      %p166 = scmp.eq.s32.totalorder %s23, 3
      %p167 = por %p165, %p166
      %p168 = scmp.ne.s32.totalorder %s159, %s160
      %p169 = scmp.eq.s32.totalorder %s23, 0
      %p170 = por %p168, %p169
      %p171 = scmp.ne.s32.totalorder %s159, %s160
      %p172 = scmp.eq.s32.totalorder %s24, 3
      %p173 = por %p171, %p172
      %p175 = scmp.ne.s32.totalorder %s160, %s174
      %p176 = scmp.eq.s32.totalorder %s24, 0
      %p177 = por %p175, %p176
      %s178 = ssub.s32 %s18, %s25
      %p179 = scmp.eq.s32.totalorder %s178, 0
      %s181 = sadd.s32 %s180, 1
      %s182 = scalar_select %p179, %s180, %s181
      %p185 = pneg %p179
      %p186 = scmp.eq.s32.totalorder %s18, 3
      %p187 = por %p185, %p186
      %p188 = scmp.ne.s32.totalorder %s180, %s183
      %p189 = scmp.eq.s32.totalorder %s18, 0
      %p190 = por %p188, %p189
      %p191 = scmp.ne.s32.totalorder %s180, %s183
      %p192 = scmp.eq.s32.totalorder %s23, 3
      %p193 = por %p191, %p192
      %p194 = scmp.ne.s32.totalorder %s183, %s184
      %p195 = scmp.eq.s32.totalorder %s23, 0
      %p196 = por %p194, %p195
      %p197 = scmp.ne.s32.totalorder %s183, %s184
      %p198 = scmp.eq.s32.totalorder %s24, 3
      %p199 = por %p197, %p198
      %p201 = scmp.ne.s32.totalorder %s184, %s200
      %p202 = scmp.eq.s32.totalorder %s24, 0
      %p203 = por %p201, %p202
      %p204 = scmp.le.s32.totalorder 1, %s18
      %p205 = scmp.lt.s32.totalorder %s18, 5
      %p206 = pnand %p204, %p205
      %p207 = pneg %p206
      // Predicated region
      $region9: #{tpu_custom_call.1} parent=5 // pred_check
        _
      $region10: #{tpu_custom_call.1} parent=5 // pred_check_branch
        %209 = sbr.rel (%p206) target = $region12
      $region11: #{tpu_custom_call.1} parent=5 // pred_region
        %s210 = ssub.s32 %s18, 1
        // Predicated region
        $region13: #{tpu_custom_call.1} parent=11 // pred_check
          %p211 = pneg %p65
        $region14: #{tpu_custom_call.1} parent=11 // pred_check_branch
          %213 = sbr.rel (%p211) target = $region16
        $region15: #{tpu_custom_call.1} parent=11 // pred_region
          _
        $region16: #{tpu_custom_call.1} parent=11 // pred_fallthru
          _
        // Predicated region
        $region17: #{tpu_custom_call.1} parent=11 // pred_check
          %p214 = pneg %p86
        $region18: #{tpu_custom_call.1} parent=11 // pred_check_branch
          %216 = sbr.rel (%p214) target = $region20
        $region19: #{tpu_custom_call.1} parent=11 // pred_region
          _
        $region20: #{tpu_custom_call.1} parent=11 // pred_fallthru
          _
        // Predicated region
        $region21: #{tpu_custom_call.1} parent=11 // pred_check
          %p217 = pneg %p107
        $region22: #{tpu_custom_call.1} parent=11 // pred_check_branch
          %219 = sbr.rel (%p217) target = $region24
        $region23: #{tpu_custom_call.1} parent=11 // pred_region
          _
        $region24: #{tpu_custom_call.1} parent=11 // pred_fallthru
          _
        // Predicated region
        $region25: #{tpu_custom_call.1} parent=11 // pred_check
          %p220 = pneg %p128
        $region26: #{tpu_custom_call.1} parent=11 // pred_check_branch
          %222 = sbr.rel (%p220) target = $region28
        $region27: #{tpu_custom_call.1} parent=11 // pred_region
          _
        $region28: #{tpu_custom_call.1} parent=11 // pred_fallthru
          _
        // Predicated region
        $region29: #{tpu_custom_call.1} parent=11 // pred_check
          %p223 = pneg %p149
        $region30: #{tpu_custom_call.1} parent=11 // pred_check_branch
          %225 = sbr.rel (%p223) target = $region32
        $region31: #{tpu_custom_call.1} parent=11 // pred_region
          _
        $region32: #{tpu_custom_call.1} parent=11 // pred_fallthru
          _
        // Predicated region
        $region33: #{tpu_custom_call.1} parent=11 // pred_check
          %p226 = pneg %p170
        $region34: #{tpu_custom_call.1} parent=11 // pred_check_branch
          %228 = sbr.rel (%p226) target = $region36
        $region35: #{tpu_custom_call.1} parent=11 // pred_region
          _
        $region36: #{tpu_custom_call.1} parent=11 // pred_fallthru
          _
      $region12: #{tpu_custom_call.1} parent=5 // pred_fallthru
        _
      %p229 = scmp.lt.s32.totalorder %s18, 4
      // Predicated region
      $region37: #{tpu_custom_call.1} parent=5 // pred_check
        %p230 = pneg %p229
      $region38: #{tpu_custom_call.1} parent=5 // pred_check_branch
        %232 = sbr.rel (%p230) target = $region40
      $region39: #{tpu_custom_call.1} parent=5 // pred_region
        // Predicated region
        $region41: #{tpu_custom_call.1} parent=39 // pred_check
          %p233 = pneg %p38
        $region42: #{tpu_custom_call.1} parent=39 // pred_check_branch
          %235 = sbr.rel (%p233) target = $region44
        $region43: #{tpu_custom_call.1} parent=39 // pred_region
          %s236 = smul.u32 16, %s18
          %p237 = scmp.lt.s32.totalorder %s236, 63
          %s238 = scalar_select %p237, %s236, 63
          %s239 = smul.addr %s238, 8
          %s240 = scalar_lea.vmem %s0, %s239
          %s241 = smul.u32 16, %s18
        $region44: #{tpu_custom_call.1} parent=39 // pred_fallthru
          _
      $region40: #{tpu_custom_call.1} parent=5 // pred_fallthru
        _
      %p242 = scmp.le.s32.totalorder 1, %s18
      %p243 = scmp.lt.s32.totalorder %s18, 5
      %p244 = pnand %p242, %p243
      %p245 = pneg %p244
      // Predicated region
      $region45: #{tpu_custom_call.1} parent=5 // pred_check
        _
      $region46: #{tpu_custom_call.1} parent=5 // pred_check_branch
        %247 = sbr.rel (%p244) target = $region48
      $region47: #{tpu_custom_call.1} parent=5 // pred_region
        %s248 = ssub.s32 %s18, 1
        %s249 = smul.u32 16, %s23
        %p250 = scmp.lt.s32.totalorder %s249, 63
        %s251 = scalar_select %p250, %s249, 63
        %s252 = smul.addr %s251, 8
        %s253 = scalar_lea.vmem %s0, %s252
        %p254 = pneg %p44
        %p255 = pneg %p41
        %p256 = pneg %p65
        %p257 = pneg %p62
        %p258 = pneg %p86
        %p259 = pneg %p83
        %p260 = pneg %p107
        %p261 = pneg %p104
        %p262 = pneg %p128
        %p263 = pneg %p125
        %p264 = pneg %p149
        %p265 = pneg %p146
        %p266 = pneg %p170
        %p267 = pneg %p167
        %p268 = pneg %p196
        %p269 = pneg %p193
        %s270 = sand.u32 %s183, 1
        %s271 = scalar_lea.sflag [#allocation4], %s270
        %s272 = sand.u32 %s183, 1
        %s273 = scalar_lea.vmem [#allocation3], %s272
        %s274 = smul.u32 16, %s23
        %p275 = scmp.lt.s32.totalorder %s274, 63
        %s276 = scalar_select %p275, %s274, 63
        %s277 = smul.addr %s276, 8
        %s278 = scalar_lea.vmem %s0, %s277
        %s279 = smul.u32 16, %s23
        %v280 = vld [vmem:[%s278] sm:$0xff]
        %v281 = vld [vmem:[%s278 + $0x8] sm:$0xff]
        %v282 = vld [vmem:[%s278 + $0x10] sm:$0xff]
        %v283 = vld [vmem:[%s278 + $0x18] sm:$0xff]
        %v284 = vld [vmem:[%s278 + $0x20] sm:$0xff]
        %v285 = vld [vmem:[%s278 + $0x28] sm:$0xff]
        %v286 = vld [vmem:[%s278 + $0x30] sm:$0xff]
        %v287 = vld [vmem:[%s278 + $0x38] sm:$0xff]
        %v288 = vld [vmem:[%s278 + $0x40] sm:$0xff]
        %v289 = vld [vmem:[%s278 + $0x48] sm:$0xff]
        %v290 = vld [vmem:[%s278 + $0x50] sm:$0xff]
        %v291 = vld [vmem:[%s278 + $0x58] sm:$0xff]
        %v292 = vld [vmem:[%s278 + $0x60] sm:$0xff]
        %v293 = vld [vmem:[%s278 + $0x68] sm:$0xff]
        %v294 = vld [vmem:[%s278 + $0x70] sm:$0xff]
        %v295 = vld [vmem:[%s278 + $0x78] sm:$0xff]
        %v296 = vld [vmem:[%s1] sm:$0x1f]
        %v297 = vld [vmem:[%s2] sm:$0x1f]
        %299 = vset.pattern.permute.xlu0 0
        %300 = vperm.xlu0 %299, %v297
        %v301 = vpop.permute.xlu0 %300
        %vm303 = vcmask 80896
        %v305 = vsel %vm303, %v296, 0
        %v308 = vsel %vm303, %v280, 0
        %v311 = vsel %vm303, %v281, 0
        %v314 = vsel %vm303, %v282, 0
        %v317 = vsel %vm303, %v283, 0
        %v320 = vsel %vm303, %v284, 0
        %v323 = vsel %vm303, %v285, 0
        %v326 = vsel %vm303, %v286, 0
        %v329 = vsel %vm303, %v287, 0
        %v332 = vsel %vm303, %v288, 0
        %v335 = vsel %vm303, %v289, 0
        %v338 = vsel %vm303, %v290, 0
        %v341 = vsel %vm303, %v291, 0
        %v344 = vsel %vm303, %v292, 0
        %v347 = vsel %vm303, %v293, 0
        %v350 = vsel %vm303, %v294, 0
        %v353 = vsel %vm303, %v295, 0
        %355 = vmatprep.subr.mxu0 0.0
        %356 = vmatpush1.xpose.msra.mxu0 %v353
        %357 = vmatprep.subr.mxu0 0.0
        %358 = vmatpush1.xpose.msra.mxu0 %v350
        %359 = vmatprep.subr.mxu0 0.0
        %360 = vmatpush1.xpose.msra.mxu0 %v347
        %361 = vmatprep.subr.mxu0 0.0
        %362 = vmatpush1.xpose.msra.mxu0 %v344
        %363 = vmatprep.subr.mxu0 0.0
        %364 = vmatpush1.xpose.msra.mxu0 %v341
        %365 = vmatprep.subr.mxu0 0.0
        %366 = vmatpush1.xpose.msra.mxu0 %v338
        %367 = vmatprep.subr.mxu0 0.0
        %368 = vmatpush1.xpose.msra.mxu0 %v335
        %369 = vmatprep.subr.mxu0 0.0
        %370 = vmatpush1.xpose.msra.mxu0 %v332
        %371 = vmatprep.subr.mxu0 0.0
        %372 = vmatpush1.xpose.msra.mxu0 %v329
        %373 = vmatprep.subr.mxu0 0.0
        %374 = vmatpush1.xpose.msra.mxu0 %v326
        %375 = vmatprep.subr.mxu0 0.0
        %376 = vmatpush1.xpose.msra.mxu0 %v323
        %377 = vmatprep.subr.mxu0 0.0
        %378 = vmatpush1.xpose.msra.mxu0 %v320
        %379 = vmatprep.subr.mxu0 0.0
        %380 = vmatpush1.xpose.msra.mxu0 %v317
        %381 = vmatprep.subr.mxu0 0.0
        %382 = vmatpush1.xpose.msra.mxu0 %v314
        %383 = vmatprep.subr.mxu0 0.0
        %384 = vmatpush1.xpose.msra.mxu0 %v311
        %385 = vmatprep.subr.mxu0 0.0
        %386 = vmatpush1.xpose.msra.mxu0 %v308
        %387 = vmatprep.subr.mxu0 0.0
        %388 = vmatpush2.xpose.msra.mxu0 0.0
        %389 = vmatprep.subr.mxu0 0.0
        %390 = vmatpush2.xpose.msra.mxu0 0.0
        %391 = vmatprep.subr.mxu0 0.0
        %392 = vmatpush2.xpose.msra.mxu0 0.0
        %393 = vmatprep.subr.mxu0 0.0
        %394 = vmatpush2.xpose.msra.mxu0 0.0
        %395 = vmatprep.subr.mxu0 0.0
        %396 = vmatpush2.xpose.msra.mxu0 0.0
        %397 = vmatprep.subr.mxu0 0.0
        %398 = vmatpush2.xpose.msra.mxu0 0.0
        %399 = vmatprep.subr.mxu0 0.0
        %400 = vmatpush2.xpose.msra.mxu0 0.0
        %401 = vmatprep.subr.mxu0 0.0
        %402 = vmatpush2.xpose.msra.mxu0 0.0
        %403 = vmatprep.subr.mxu0 0.0
        %404 = vmatpush2.xpose.msra.mxu0 0.0
        %405 = vmatprep.subr.mxu0 0.0
        %406 = vmatpush2.xpose.msra.mxu0 0.0
        %407 = vmatprep.subr.mxu0 0.0
        %408 = vmatpush2.xpose.msra.mxu0 0.0
        %409 = vmatprep.subr.mxu0 0.0
        %410 = vmatpush2.xpose.msra.mxu0 0.0
        %411 = vmatprep.subr.mxu0 0.0
        %412 = vmatpush2.xpose.msra.mxu0 0.0
        %413 = vmatprep.subr.mxu0 0.0
        %414 = vmatpush2.xpose.msra.mxu0 0.0
        %415 = vmatprep.subr.mxu0 0.0
        %416 = vmatpush2.xpose.msra.mxu0 0.0
        %417 = vmatprep.subr.mxu0 0.0
        %418 = vmatpush2.xpose.msra.mxu0 0.0
        %419 = vmatprep.mubr.f32.mxu0 0.0
        %420 = vmatmul.mubr.f32.gmra.mxu0 %v305
        %v421 = vpop.f32.mrf.mxu0
        %v422 = vadd.f32 %v301, %v421
        %v423 = vpop.f32.mrf.mxu0
        %424 = vdwg.mxu0
        %v425 = vmax.f32 %v422, 0.0
        %v426 = vld [vmem:[%s3] sm:$0x7]
        %v427 = vld [vmem:[%s4] sm:$0x7]
        %429 = vset.pattern.permute.xlu0 0
        %430 = vperm.xlu0 %429, %v427
        %v431 = vpop.permute.xlu0 %430
        %vm433 = vcmask 39936
        %v435 = vsel %vm433, %v426, 0
        %vm437 = vcmask 1044480
        %v439 = vsel %vm437, %v425, 0
        %441 = vmatprep.subr.mxu0 0.0
        %442 = vmatpush1.msra.mxu0 0.0
        %443 = vmatprep.subr.mxu0 0.0
        %444 = vmatpush1.msra.mxu0 0.0
        %445 = vmatprep.subr.mxu0 0.0
        %446 = vmatpush1.msra.mxu0 0.0
        %447 = vmatprep.subr.mxu0 0.0
        %448 = vmatpush1.msra.mxu0 0.0
        %449 = vmatprep.subr.mxu0 0.0
        %450 = vmatpush1.msra.mxu0 0.0
        %451 = vmatprep.subr.mxu0 0.0
        %452 = vmatpush1.msra.mxu0 0.0
        %453 = vmatprep.subr.mxu0 0.0
        %454 = vmatpush1.msra.mxu0 0.0
        %455 = vmatprep.subr.mxu0 0.0
        %456 = vmatpush1.msra.mxu0 0.0
        %457 = vmatprep.subr.mxu0 0.0
        %458 = vmatpush1.msra.mxu0 0.0
        %459 = vmatprep.subr.mxu0 0.0
        %460 = vmatpush1.msra.mxu0 0.0
        %461 = vmatprep.subr.mxu0 0.0
        %462 = vmatpush1.msra.mxu0 0.0
        %463 = vmatprep.subr.mxu0 0.0
        %464 = vmatpush1.msra.mxu0 0.0
        %465 = vmatprep.subr.mxu0 0.0
        %466 = vmatpush1.msra.mxu0 0.0
        %467 = vmatprep.subr.mxu0 0.0
        %468 = vmatpush1.msra.mxu0 0.0
        %469 = vmatprep.subr.mxu0 0.0
        %470 = vmatpush1.msra.mxu0 0.0
        %471 = vmatprep.subr.mxu0 0.0
        %472 = vmatpush1.msra.mxu0 %v439
        %473 = vmatprep.subr.mxu0 0.0
        %474 = vmatpush2.msra.mxu0 0.0
        %475 = vmatprep.subr.mxu0 0.0
        %476 = vmatpush2.msra.mxu0 0.0
        %477 = vmatprep.subr.mxu0 0.0
        %478 = vmatpush2.msra.mxu0 0.0
        %479 = vmatprep.subr.mxu0 0.0
        %480 = vmatpush2.msra.mxu0 0.0
        %481 = vmatprep.subr.mxu0 0.0
        %482 = vmatpush2.msra.mxu0 0.0
        %483 = vmatprep.subr.mxu0 0.0
        %484 = vmatpush2.msra.mxu0 0.0
        %485 = vmatprep.subr.mxu0 0.0
        %486 = vmatpush2.msra.mxu0 0.0
        %487 = vmatprep.subr.mxu0 0.0
        %488 = vmatpush2.msra.mxu0 0.0
        %489 = vmatprep.subr.mxu0 0.0
        %490 = vmatpush2.msra.mxu0 0.0
        %491 = vmatprep.subr.mxu0 0.0
        %492 = vmatpush2.msra.mxu0 0.0
        %493 = vmatprep.subr.mxu0 0.0
        %494 = vmatpush2.msra.mxu0 0.0
        %495 = vmatprep.subr.mxu0 0.0
        %496 = vmatpush2.msra.mxu0 0.0
        %497 = vmatprep.subr.mxu0 0.0
        %498 = vmatpush2.msra.mxu0 0.0
        %499 = vmatprep.subr.mxu0 0.0
        %500 = vmatpush2.msra.mxu0 0.0
        %501 = vmatprep.subr.mxu0 0.0
        %502 = vmatpush2.msra.mxu0 0.0
        %503 = vmatprep.subr.mxu0 0.0
        %504 = vmatpush2.msra.mxu0 0.0
        %505 = vmatprep.mubr.f32.mxu0 0.0
        %506 = vmatmul.mubr.f32.gmra.mxu0 %v435
        %v507 = vpop.f32.mrf.mxu0
        %v508 = vadd.f32 %v431, %v507
        %v509 = vpop.f32.mrf.mxu0
        %510 = vdwg.mxu0
        %v511 = vmax.f32 %v508, 0.0
        %v512 = vld [vmem:[%s5] sm:$0x1]
        %v513 = vld [vmem:[#allocation2] sm:$0x1]
        %515 = vset.pattern.permute.xlu0 0
        %516 = vperm.xlu0 %515, %v513
        %v517 = vpop.permute.xlu0 %516
        %v519 = vlaneseq
        %v520 = vshrl.u32 %v519, 7
        %v521 = vsub.s32 0, %v520
        %v522 = vrot.slane %v517, %v521
        %vm523 = vcmask 23552
        %v525 = vsel %vm523, %v512, 0
        %vm527 = vcmask 1042432
        %v529 = vsel %vm527, %v511, 0
        %531 = vmatprep.subr.mxu0 0.0
        %532 = vmatpush1.msra.mxu0 0.0
        %533 = vmatprep.subr.mxu0 0.0
        %534 = vmatpush1.msra.mxu0 0.0
        %535 = vmatprep.subr.mxu0 0.0
        %536 = vmatpush1.msra.mxu0 0.0
        %537 = vmatprep.subr.mxu0 0.0
        %538 = vmatpush1.msra.mxu0 0.0
        %539 = vmatprep.subr.mxu0 0.0
        %540 = vmatpush1.msra.mxu0 0.0
        %541 = vmatprep.subr.mxu0 0.0
        %542 = vmatpush1.msra.mxu0 0.0
        %543 = vmatprep.subr.mxu0 0.0
        %544 = vmatpush1.msra.mxu0 0.0
        %545 = vmatprep.subr.mxu0 0.0
        %546 = vmatpush1.msra.mxu0 0.0
        %547 = vmatprep.subr.mxu0 0.0
        %548 = vmatpush1.msra.mxu0 0.0
        %549 = vmatprep.subr.mxu0 0.0
        %550 = vmatpush1.msra.mxu0 0.0
        %551 = vmatprep.subr.mxu0 0.0
        %552 = vmatpush1.msra.mxu0 0.0
        %553 = vmatprep.subr.mxu0 0.0
        %554 = vmatpush1.msra.mxu0 0.0
        %555 = vmatprep.subr.mxu0 0.0
        %556 = vmatpush1.msra.mxu0 0.0
        %557 = vmatprep.subr.mxu0 0.0
        %558 = vmatpush1.msra.mxu0 0.0
        %559 = vmatprep.subr.mxu0 0.0
        %560 = vmatpush1.msra.mxu0 0.0
        %561 = vmatprep.subr.mxu0 0.0
        %562 = vmatpush1.msra.mxu0 %v529
        %563 = vmatprep.subr.mxu0 0.0
        %564 = vmatpush2.msra.mxu0 0.0
        %565 = vmatprep.subr.mxu0 0.0
        %566 = vmatpush2.msra.mxu0 0.0
        %567 = vmatprep.subr.mxu0 0.0
        %568 = vmatpush2.msra.mxu0 0.0
        %569 = vmatprep.subr.mxu0 0.0
        %570 = vmatpush2.msra.mxu0 0.0
        %571 = vmatprep.subr.mxu0 0.0
        %572 = vmatpush2.msra.mxu0 0.0
        %573 = vmatprep.subr.mxu0 0.0
        %574 = vmatpush2.msra.mxu0 0.0
        %575 = vmatprep.subr.mxu0 0.0
        %576 = vmatpush2.msra.mxu0 0.0
        %577 = vmatprep.subr.mxu0 0.0
        %578 = vmatpush2.msra.mxu0 0.0
        %579 = vmatprep.subr.mxu0 0.0
        %580 = vmatpush2.msra.mxu0 0.0
        %581 = vmatprep.subr.mxu0 0.0
        %582 = vmatpush2.msra.mxu0 0.0
        %583 = vmatprep.subr.mxu0 0.0
        %584 = vmatpush2.msra.mxu0 0.0
        %585 = vmatprep.subr.mxu0 0.0
        %586 = vmatpush2.msra.mxu0 0.0
        %587 = vmatprep.subr.mxu0 0.0
        %588 = vmatpush2.msra.mxu0 0.0
        %589 = vmatprep.subr.mxu0 0.0
        %590 = vmatpush2.msra.mxu0 0.0
        %591 = vmatprep.subr.mxu0 0.0
        %592 = vmatpush2.msra.mxu0 0.0
        %593 = vmatprep.subr.mxu0 0.0
        %594 = vmatpush2.msra.mxu0 0.0
        %595 = vmatprep.mubr.f32.mxu0 0.0
        %596 = vmatmul.mubr.f32.gmra.mxu0 %v525
        %v597 = vpop.f32.mrf.mxu0
        %v598 = vadd.f32 %v522, %v597
        %v599 = vpop.f32.mrf.mxu0
        %600 = vdwg.mxu0
        %601 = vst [vmem:[%s273] sm:$0x1] %v598
        %s602 = sand.u32 %s183, 1
        %s603 = scalar_lea.sflag [#allocation4], %s602
        %s604 = sand.u32 %s183, 1
        %s605 = scalar_lea.vmem [#allocation3], %s604
        // Predicated region
        $region49: #{tpu_custom_call.1} parent=47 // pred_check
          %p606 = pneg %p193
        $region50: #{tpu_custom_call.1} parent=47 // pred_check_branch
          %608 = sbr.rel (%p606) target = $region52
        $region51: #{tpu_custom_call.1} parent=47 // pred_region
          %s610 = ssub.s32 16, 16
          %611 = vsyncadd %s603, %s610
          %s612 = smul.addr %s23, 16
          %s613 = scalar_lea.hbm %s7, %s612
          %s615 = sshll.u32 %s605, 4
          %s616 = int_to_ptr.vmem [resolvable:$true] %s615
          %618 = dma.vmem_to_hbm [thread:$0]  %s616, 16, %s613, %s603
        $region52: #{tpu_custom_call.1} parent=47 // pred_fallthru
          _
      $region48: #{tpu_custom_call.1} parent=5 // pred_fallthru
        _
      %p619 = scmp.le.s32.totalorder 2, %s18
      // Predicated region
      $region53: #{tpu_custom_call.1} parent=5 // pred_check
        %p620 = pneg %p619
      $region54: #{tpu_custom_call.1} parent=5 // pred_check_branch
        %622 = sbr.rel (%p620) target = $region56
      $region55: #{tpu_custom_call.1} parent=5 // pred_region
        %s623 = ssub.s32 %s18, 2
        // Predicated region
        $region57: #{tpu_custom_call.1} parent=55 // pred_check
          %p624 = pneg %p199
        $region58: #{tpu_custom_call.1} parent=55 // pred_check_branch
          %626 = sbr.rel (%p624) target = $region60
        $region59: #{tpu_custom_call.1} parent=55 // pred_region
          %s627 = sand.u32 %s184, 1
          %s628 = scalar_lea.sflag [#allocation4], %s627
          %s629 = sand.u32 %s184, 1
          %s630 = scalar_lea.vmem [#allocation3], %s629
          %631 = dma.done %s628, 16
        $region60: #{tpu_custom_call.1} parent=55 // pred_fallthru
          _
      $region56: #{tpu_custom_call.1} parent=5 // pred_fallthru
        _
    $region6: #{tpu_custom_call.1} parent=1 // loop_footer
      %s22 = sadd.s32 1, %s18
    $region7: #{tpu_custom_call.1} parent=1 // loop_footer_branch
      %17 = sbr.rel target = $region3
    $region8: #{tpu_custom_call.1} parent=1 // loop_exit
      _
    %632 = vsyncpa [#allocation4], 1
    %s633 = scalar_lea.sflag [#allocation4], 1
    %634 = vsyncpa %s633, 1

</llo_original>
